<compile_context>
chip_gen: v6e
topology: v6e:2x2x1
jax: 0.10.0
libtpu: 0.0.40
codegen_flags: <defaults>
</compile_context>

<pallas_src>
import jax
import jax.numpy as jnp
from jax.experimental import pallas as pl
from jax.experimental.pallas import tpu as pltpu


def _identity_kernel(x_ref, o_ref):
    # fe = nn.Sequential() with no layers -> y = x
    o_ref[...] = x_ref[...]


def fe_identity(x2d):
    """Pallas identity (empty nn.Sequential).

    x2d: (R, 128) lane-dense 2D slab. Small enough (8 KiB for the demo shape)
    that the whole array is a single VMEM block: no grid, no pipelining.
    """
    return pl.pallas_call(
        _identity_kernel,
        out_shape=jax.ShapeDtypeStruct(x2d.shape, x2d.dtype),
        in_specs=[pl.BlockSpec(memory_space=pltpu.MemorySpace.VMEM)],
        out_specs=pl.BlockSpec(memory_space=pltpu.MemorySpace.VMEM),
        input_output_aliases={0: 0},  # identity: alias output to input buffer
    )(x2d)


@jax.jit
def modelB_forward(x_nchw):
    """Forward pass of modelB.

    fe   : empty nn.Sequential -> identity (Pallas VMEM copy kernel).
    head : None in the reference module (PyTorch forward would raise
           TypeError when calling None); nothing to apply.
    """
    n, c, h, w = x_nchw.shape
    total = n * c * h * w
    assert total % 128 == 0, "flattened size must be lane-divisible for this demo"
    x2d = x_nchw.reshape(total // 128, 128)  # lane-dense slab for the copy
    y2d = fe_identity(x2d)
    y = y2d.reshape(n, c, h, w)
    # TODO(synk): self.head is None in the PyTorch module (its forward would
    # raise TypeError); returning the fe (identity) output instead.
    return y


if __name__ == "__main__":
    key = jax.random.PRNGKey(0)
    x = jax.random.normal(key, (2, 4, 16, 16), dtype=jnp.float32)  # NCHW
    y = modelB_forward(x)
    y = jax.block_until_ready(y)
    assert y.shape == x.shape
    assert bool(jnp.allclose(y, x))
    print("KERNEL_OK")
</pallas_src>

<mosaic_0001>
module attributes {stable_mosaic.version = 11 : i64} {
  func.func @_identity_kernel(%arg0: memref<16x128xf32, #tpu.memory_space<vmem>>, %arg1: memref<16x128xf32, #tpu.memory_space<vmem>>) attributes {dimension_semantics = [], scalar_prefetch = 0 : i64, scratch_operands = 0 : i64, tpu.core_type = #tpu.core_type<tc>} {
    %c0 = arith.constant 0 : index
    %c0_0 = arith.constant 0 : index
    %0 = vector.load %arg0[%c0, %c0_0] : memref<16x128xf32, #tpu.memory_space<vmem>>, vector<16x128xf32>
    %c0_1 = arith.constant 0 : index
    %c0_2 = arith.constant 0 : index
    %1 = vector.load %arg1[%c0_1, %c0_2] : memref<16x128xf32, #tpu.memory_space<vmem>>, vector<16x128xf32>
    tpu.vector_store %arg1[%c0_1, %c0_2], %0 {strides = array<i32>} : memref<16x128xf32, #tpu.memory_space<vmem>>, vector<16x128xf32>,
    return
  }
}

</mosaic_0001>

<llo_original>
// kernel: modelB_forward.1
$region0: #{modelB_forward.1}
  #allocation0 [shape = 'u32[]', space=smem, size = 0x4, offset = 0x4, fixed_abs, tag = 'smem constant byte address 0x4 - core index']
  #allocation1 [shape = 'u32[144,128]{1,0:T(1,128)}', space=vmem, size = 0x12000, scoped, tag = 'internal scratch']
  %s0 = inlined_call_operand.vmem [shape: f32[16,128], index: 0, kind: input, shape index: {}, may-alias: {0,1}]
  %s1 = inlined_call_operand.vmem [shape: f32[16,128], index: 1, kind: output, shape index: {}, may-alias: {0,1}]
  %s2 = sld [smem:[#allocation0]]
  $region14: #{modelB_forward.1} parent=0
    _
  %s4 = ssub.s32 1, %s2
  %s5 = scalar_select 0, %s4, %s2
  // Predicated region
  $region2: #{modelB_forward.1} parent=0 // pred_check
    _
  $region3: #{modelB_forward.1} parent=0 // pred_check_branch
    %7 = sbr.rel (0) target = $region5
  $region4: #{modelB_forward.1} parent=0 // pred_region
    _
  $region5: #{modelB_forward.1} parent=0 // pred_fallthru
    _
  %v8 = vld [vmem:[%s0] sm:$0xff]
  %v9 = vld [vmem:[%s0 + $0x8] sm:$0xff]
  %10 = vst [vmem:[%s1] sm:$0xff] %v8
  %11 = vst [vmem:[%s1 + $0x8] sm:$0xff] %v9
  // Predicated region
  $region6: #{modelB_forward.1} parent=0 // pred_check
    _
  $region7: #{modelB_forward.1} parent=0 // pred_check_branch
    %13 = sbr.rel (0) target = $region9
  $region8: #{modelB_forward.1} parent=0 // pred_region
    _
  $region9: #{modelB_forward.1} parent=0 // pred_fallthru
    _
  // Predicated region
  $region10: #{modelB_forward.1} parent=0 // pred_check
    _
  $region11: #{modelB_forward.1} parent=0 // pred_check_branch
    %15 = sbr.rel (0) target = $region13
  $region12: #{modelB_forward.1} parent=0 // pred_region
    _
  $region13: #{modelB_forward.1} parent=0 // pred_fallthru
    _

</llo_original>
